<compile_context>
chip_gen: v6e
topology: v6e:2x2x1
jax: 0.10.0
libtpu: 0.0.40
codegen_flags: <defaults>
</compile_context>

<pallas_src>
import functools

import jax
import jax.numpy as jnp
import numpy as np
from jax.experimental import pallas as pl
from jax.experimental.pallas import tpu as pltpu


def _masked_norm_kernel(data_ref, mask_nk_ref, mask_kn_ref, w_ref, b_ref, out_ref,
                        *, max_ids, eps):
    x = data_ref[...].astype(jnp.float32)          # (Bt, N, Ct)
    m_nk = mask_nk_ref[...]                        # (Bt, N, 1)  int32
    m_kn = mask_kn_ref[...]                        # (Bt, 1, N)  int32
    w = w_ref[...].astype(jnp.float32)             # (1, Ct)
    b = b_ref[...].astype(jnp.float32)             # (1, Ct)
    Ct = x.shape[-1]

    # Conditioning shift (variance is shift-invariant): per-(batch, channel)
    # mean over nodes.  Keeps the one-pass E[x^2]-mean^2 variance well
    # conditioned for non-centered inputs (coordinate-like features).
    c0 = jnp.mean(x, axis=1, keepdims=True)        # (Bt, 1, Ct)
    xc = x - c0                                    # (Bt, N, Ct)

    # One-hot encodings of mask ids 1..max_ids in both matmul-friendly layouts
    # (no in-kernel transposes: both dot_generals below are canonical).
    ids_lane = jax.lax.broadcasted_iota(jnp.int32, (1, 1, max_ids), 2) + 1
    ids_subl = jax.lax.broadcasted_iota(jnp.int32, (1, max_ids, 1), 1) + 1
    oh_nk = (m_nk == ids_lane).astype(jnp.float32)   # (Bt, N, K)
    oh_kn = (m_kn == ids_subl).astype(jnp.float32)   # (Bt, K, N)

    # Fused per-(batch, id) masked sums of [xc, xc^2]: ONE MXU pass over the slab.
    xcat = jnp.concatenate([xc, xc * xc], axis=-1)                 # (Bt, N, 2Ct)
    sums = jnp.einsum('bkn,bnc->bkc', oh_kn, xcat,
                      preferred_element_type=jnp.float32)          # (Bt, K, 2Ct)
    sum_x = sums[..., :Ct]                                         # (Bt, K, Ct)
    sum_x2 = sums[..., Ct:]                                        # (Bt, K, Ct)
    cnt = jnp.sum(oh_kn, axis=-1, keepdims=True)                   # (Bt, K, 1)
    inv_cnt = 1.0 / jnp.maximum(cnt, 1.0)                          # safe 0/0 -> 0

    mean = sum_x * inv_cnt                                         # centered-frame mean
    var = jnp.maximum(sum_x2 * inv_cnt - mean * mean, 0.0)
    rstd = jax.lax.rsqrt(var + eps)                                # EUP slot

    # Fold the affine weight:  per-id  out = xc * scale_k + shift_k (+ bias).
    scale = rstd * w                                               # (Bt, K, Ct)
    shift = -mean * scale                                          # (Bt, K, Ct)

    # Fused gather of per-node [scale, shift] (ids are disjoint): ONE MXU matmul.
    ss = jnp.concatenate([scale, shift], axis=-1)                  # (Bt, K, 2Ct)
    node_ss = jnp.einsum('bnk,bkc->bnc', oh_nk, ss,
                         preferred_element_type=jnp.float32)       # (Bt, N, 2Ct)
    node_scale = node_ss[..., :Ct]
    node_shift = node_ss[..., Ct:]

    # Single fused normalize + affine bias + final (mask != 0) pass.
    # (bias kept un-folded so nodes whose id is outside 1..max_ids still get
    #  the affine bias, matching the reference semantics.)
    valid = (m_nk != 0).astype(jnp.float32)                        # (Bt, N, 1)
    out = (xc * node_scale + node_shift + b) * valid
    out_ref[...] = out.astype(out_ref.dtype)


def masked_norm(data, mask, weights, bias, *, max_ids=4, eps=1e-5):
    """MaskedNorm(dim=1, norm='instance', affine=True) forward."""
    B, N, C = data.shape
    out_dtype = data.dtype
    in_bytes = jnp.dtype(data.dtype).itemsize
    out_bytes = in_bytes

    # ---------------- explicit VMEM budgeting ----------------
    F32 = 4
    N_F32_TEMPS = 8          # xc, xcat(2), node_ss(2), out, x, slack
    VMEM_BUDGET = 40 * (1 << 20)   # fits v7x 64 MiB/TC; well under v5e/v6e 128 MiB

    def footprint(bt, ct):
        slab = bt * N * ct
        # 2x double-buffered input + 2x double-buffered output + f32 temporaries
        return slab * (2 * in_bytes + 2 * out_bytes + N_F32_TEMPS * F32)

    # Preferred path: NO channel padding / slicing.  A full-C last-dim block is
    # legal for any C, and avoiding the wrapper-side pad + slice saves two full
    # HBM passes over the big tensor (this kernel is HBM-bound).
    needs_chan_tiling = footprint(1, C) > VMEM_BUDGET and C > 128
    if not needs_chan_tiling:
        # TODO(synk): if even a single-batch full-C slab exceeds the budget
        # (very long N with small C), we still proceed untiled along N.
        data_p = data
        w_p = weights.astype(jnp.float32).reshape(1, C)
        b_p = bias.astype(jnp.float32).reshape(1, C)
        C_pad, Ct = C, C
    else:
        # Rare fallback: channel tiling requires lane-aligned (128x) blocks.
        C_pad = 128 * pl.cdiv(C, 128)
        Ct = 128
        for cand in (512, 384, 256):
            if C_pad % cand == 0 and footprint(1, cand) <= VMEM_BUDGET:
                Ct = cand
                break
        if C_pad != C:
            data_p = jnp.pad(data, ((0, 0), (0, 0), (0, C_pad - C)))
            w_p = jnp.pad(weights.astype(jnp.float32), (0, C_pad - C)).reshape(1, C_pad)
            b_p = jnp.pad(bias.astype(jnp.float32), (0, C_pad - C)).reshape(1, C_pad)
        else:
            data_p = data
            w_p = weights.astype(jnp.float32).reshape(1, C_pad)
            b_p = bias.astype(jnp.float32).reshape(1, C_pad)

    # Batch tile from the VMEM budget; cdiv grid allows a ragged last block
    # (garbage rows never cross batches and their writeback is discarded).
    per_batch = footprint(1, Ct)
    Bt = int(max(1, min(B, VMEM_BUDGET // max(per_batch, 1))))
    batch_grid = pl.cdiv(B, Bt)
    chan_grid = C_pad // Ct

    # v7x megacore: guarantee >=2 steps along a "parallel" axis when possible.
    if batch_grid == 1 and chan_grid == 1 and B > 1:
        Bt = (B + 1) // 2
        batch_grid = pl.cdiv(B, Bt)

    step_bytes = footprint(Bt, Ct)
    vmem_limit = int(min(max(step_bytes * 5 // 4 + (2 << 20), 32 << 20), 100 << 20))

    # Mask in both matmul-friendly layouts (tiny arrays; wrapper-side reshape).
    mask_nk = mask.reshape(B, N, 1).astype(jnp.int32)
    mask_kn = mask.reshape(B, 1, N).astype(jnp.int32)

    grid = (batch_grid, chan_grid)
    kernel = functools.partial(_masked_norm_kernel, max_ids=max_ids, eps=eps)

    out = pl.pallas_call(
        kernel,
        out_shape=jax.ShapeDtypeStruct((B, N, C_pad), out_dtype),
        grid=grid,
        in_specs=[
            pl.BlockSpec((Bt, N, Ct), lambda i, j: (i, 0, j)),   # data slab
            pl.BlockSpec((Bt, N, 1), lambda i, j: (i, 0, 0)),    # mask (node-major)
            pl.BlockSpec((Bt, 1, N), lambda i, j: (i, 0, 0)),    # mask (id-major)
            pl.BlockSpec((1, Ct), lambda i, j: (0, j)),          # affine weight
            pl.BlockSpec((1, Ct), lambda i, j: (0, j)),          # affine bias
        ],
        out_specs=pl.BlockSpec((Bt, N, Ct), lambda i, j: (i, 0, j)),
        compiler_params=pltpu.CompilerParams(
            dimension_semantics=("parallel", "parallel"),
            vmem_limit_bytes=vmem_limit),
    )(data_p, mask_nk, mask_kn, w_p, b_p)

    return out[..., :C] if C_pad != C else out


def _reference(data, mask, weights, bias, *, max_ids=4, eps=1e-5):
    """Pure-JAX reference mirroring the PyTorch masked 'instance1' path."""
    B, N, C = data.shape
    m = mask[..., None].astype(data.dtype)                   # (B, N, 1)
    out = jnp.zeros_like(data)
    for mask_id in range(1, max_ids + 1):
        tmask = (m == mask_id).astype(data.dtype)
        cnt = jnp.sum(tmask, axis=1, keepdims=True)
        cnt_safe = jnp.maximum(cnt, 1.0)
        mean = jnp.sum(data * tmask, axis=1, keepdims=True) / cnt_safe
        var = jnp.sum(((data - mean) * tmask) ** 2, axis=1, keepdims=True) / cnt_safe
        std = jnp.sqrt(var + eps)
        out = out + (data - mean) / std * tmask
    out = out * weights.reshape(1, 1, C) + bias.reshape(1, 1, C)
    out = out * (m != 0).astype(data.dtype)
    return out


if __name__ == "__main__":
    B, N, C = 2, 16, 32
    MAX_IDS = 4
    EPS = 1e-5

    key = jax.random.PRNGKey(0)
    k_data, k_w = jax.random.split(key)

    # Non-centered data to exercise the conditioned one-pass variance path.
    data = jax.random.normal(k_data, (B, N, C), dtype=jnp.float32) + 3.0

    # Deterministic chain-style mask: ids in {0, 1, 2}; 0 = padding.
    mask_np = np.zeros((B, N), dtype=np.int32)
    mask_np[0, 0:6] = 1
    mask_np[0, 6:12] = 2
    mask_np[0, 12:] = 0
    mask_np[1, 0:8] = 1
    mask_np[1, 8:16] = 2
    mask = jnp.asarray(mask_np)

    # Affine params: torch.rand -> uniform[0,1); bias -> zeros (deterministic init).
    weights = jax.random.uniform(k_w, (C,), dtype=jnp.float32)
    bias = jnp.zeros((C,), dtype=jnp.float32)

    out = masked_norm(data, mask, weights, bias, max_ids=MAX_IDS, eps=EPS)
    out = jax.block_until_ready(out)

    ref = _reference(data, mask, weights, bias, max_ids=MAX_IDS, eps=EPS)
    np.testing.assert_allclose(np.asarray(out), np.asarray(ref), rtol=1e-4, atol=1e-5)

    print("KERNEL_OK")
</pallas_src>

<mosaic_0001>
module attributes {stable_mosaic.version = 11 : i64} {
  func.func @_masked_norm_kernel(%arg0: i32, %arg1: i32, %arg2: memref<1x16x32xf32, #tpu.memory_space<vmem>>, %arg3: memref<1x16x1xi32, #tpu.memory_space<vmem>>, %arg4: memref<1x1x16xi32, #tpu.memory_space<vmem>>, %arg5: memref<1x32xf32, #tpu.memory_space<vmem>>, %arg6: memref<1x32xf32, #tpu.memory_space<vmem>>, %arg7: memref<1x16x32xf32, #tpu.memory_space<vmem>>) attributes {dimension_semantics = [#tpu.dimension_semantics<parallel>, #tpu.dimension_semantics<parallel>], iteration_bounds = array<i64: 2, 1>, scalar_prefetch = 0 : i64, scratch_operands = 0 : i64, tpu.core_type = #tpu.core_type<tc>, window_params = [{transform_indices = @transform_0, window_bounds = array<i64: 1, 16, 32>}, {transform_indices = @transform_1, window_bounds = array<i64: 1, 16, 1>}, {transform_indices = @transform_2, window_bounds = array<i64: 1, 1, 16>}, {transform_indices = @transform_3, window_bounds = array<i64: 1, 32>}, {transform_indices = @transform_4, window_bounds = array<i64: 1, 32>}, {transform_indices = @transform_5, window_bounds = array<i64: 1, 16, 32>}]} {
    %c0 = arith.constant 0 : index
    %c0_0 = arith.constant 0 : index
    %c0_1 = arith.constant 0 : index
    %0 = vector.load %arg2[%c0, %c0_0, %c0_1] : memref<1x16x32xf32, #tpu.memory_space<vmem>>, vector<1x16x32xf32>
    %c0_2 = arith.constant 0 : index
    %c0_3 = arith.constant 0 : index
    %c0_4 = arith.constant 0 : index
    %1 = vector.load %arg3[%c0_2, %c0_3, %c0_4] : memref<1x16x1xi32, #tpu.memory_space<vmem>>, vector<1x16x1xi32>
    %c0_5 = arith.constant 0 : index
    %c0_6 = arith.constant 0 : index
    %c0_7 = arith.constant 0 : index
    %2 = vector.load %arg4[%c0_5, %c0_6, %c0_7] : memref<1x1x16xi32, #tpu.memory_space<vmem>>, vector<1x1x16xi32>
    %c0_8 = arith.constant 0 : index
    %c0_9 = arith.constant 0 : index
    %3 = vector.load %arg5[%c0_8, %c0_9] : memref<1x32xf32, #tpu.memory_space<vmem>>, vector<1x32xf32>
    %c0_10 = arith.constant 0 : index
    %c0_11 = arith.constant 0 : index
    %4 = vector.load %arg6[%c0_10, %c0_11] : memref<1x32xf32, #tpu.memory_space<vmem>>, vector<1x32xf32>
    %cst = arith.constant dense<0.000000e+00> : vector<1x32xf32>
    %5 = vector.multi_reduction <add>, %0, %cst [1] : vector<1x16x32xf32> to vector<1x32xf32>
    %6 = vector.shape_cast %5 : vector<1x32xf32> to vector<1x1x32xf32>
    %cst_12 = arith.constant 1.600000e+01 : f32
    %7 = vector.broadcast %cst_12 : f32 to vector<1x1x32xf32>
    %8 = arith.divf %6, %7 : vector<1x1x32xf32>
    %9 = vector.broadcast %8 : vector<1x1x32xf32> to vector<1x16x32xf32>
    %10 = arith.subf %0, %9 : vector<1x16x32xf32>
    %11 = tpu.iota {dimensions = array<i32: 2>} : vector<1x1x4xi32>
    %c1_i32 = arith.constant 1 : i32
    %12 = vector.broadcast %c1_i32 : i32 to vector<1x1x4xi32>
    %13 = arith.addi %11, %12 : vector<1x1x4xi32>
    %14 = tpu.iota {dimensions = array<i32: 1>} : vector<1x4x1xi32>
    %c1_i32_13 = arith.constant 1 : i32
    %15 = vector.broadcast %c1_i32_13 : i32 to vector<1x4x1xi32>
    %16 = arith.addi %14, %15 : vector<1x4x1xi32>
    %17 = vector.broadcast %1 : vector<1x16x1xi32> to vector<1x16x4xi32>
    %18 = vector.broadcast %13 : vector<1x1x4xi32> to vector<1x16x4xi32>
    %19 = arith.cmpi eq, %17, %18 : vector<1x16x4xi32>
    %20 = arith.extui %19 : vector<1x16x4xi1> to vector<1x16x4xi32>
    %21 = arith.sitofp %20 : vector<1x16x4xi32> to vector<1x16x4xf32>
    %22 = vector.broadcast %2 : vector<1x1x16xi32> to vector<1x4x16xi32>
    %23 = vector.broadcast %16 : vector<1x4x1xi32> to vector<1x4x16xi32>
    %24 = arith.cmpi eq, %22, %23 : vector<1x4x16xi32>
    %25 = arith.extui %24 : vector<1x4x16xi1> to vector<1x4x16xi32>
    %26 = arith.sitofp %25 : vector<1x4x16xi32> to vector<1x4x16xf32>
    %27 = arith.mulf %10, %10 : vector<1x16x32xf32>
    %28 = tpu.concatenate %10, %27 in 2 : vector<1x16x32xf32>, vector<1x16x32xf32> -> vector<1x16x64xf32>
    "tpu.trace_start"() <{level = 10 : i32, message = "bkn,bnc->bkc"}> : () -> ()
    %cst_14 = arith.constant dense<0.000000e+00> : vector<1x4x64xf32>
    %29 = tpu.matmul %26, %28, %cst_14 {dimension_numbers = #tpu.dot_dimension_numbers<[2], [1], [1], [2], [0, 0, 0, 1, 1, 2], [0], [0]>} : vector<1x4x16xf32>, vector<1x16x64xf32>, vector<1x4x64xf32> -> vector<1x4x64xf32>
    "tpu.trace_stop"() : () -> ()
    %30 = vector.extract_strided_slice %29 {offsets = [0, 0, 0], sizes = [1, 4, 32], strides = [1, 1, 1]} : vector<1x4x64xf32> to vector<1x4x32xf32>
    %31 = vector.extract_strided_slice %29 {offsets = [0, 0, 32], sizes = [1, 4, 32], strides = [1, 1, 1]} : vector<1x4x64xf32> to vector<1x4x32xf32>
    %cst_15 = arith.constant dense<0.000000e+00> : vector<1x4xf32>
    %32 = vector.multi_reduction <add>, %26, %cst_15 [2] : vector<1x4x16xf32> to vector<1x4xf32>
    %33 = vector.shape_cast %32 : vector<1x4xf32> to vector<1x4x1xf32>
    %cst_16 = arith.constant 1.000000e+00 : f32
    %34 = vector.broadcast %cst_16 : f32 to vector<1x4x1xf32>
    %35 = arith.maximumf %33, %34 : vector<1x4x1xf32>
    %cst_17 = arith.constant 1.000000e+00 : f32
    %36 = vector.broadcast %cst_17 : f32 to vector<1x4x1xf32>
    %37 = arith.divf %36, %35 : vector<1x4x1xf32>
    %38 = vector.broadcast %37 : vector<1x4x1xf32> to vector<1x4x32xf32>
    %39 = arith.mulf %30, %38 : vector<1x4x32xf32>
    %40 = vector.broadcast %37 : vector<1x4x1xf32> to vector<1x4x32xf32>
    %41 = arith.mulf %31, %40 : vector<1x4x32xf32>
    %42 = arith.mulf %39, %39 : vector<1x4x32xf32>
    %43 = arith.subf %41, %42 : vector<1x4x32xf32>
    %cst_18 = arith.constant 0.000000e+00 : f32
    %44 = vector.broadcast %cst_18 : f32 to vector<1x4x32xf32>
    %45 = arith.maximumf %43, %44 : vector<1x4x32xf32>
    %cst_19 = arith.constant 9.99999974E-6 : f32
    %46 = vector.broadcast %cst_19 : f32 to vector<1x4x32xf32>
    %47 = arith.addf %45, %46 : vector<1x4x32xf32>
    %48 = math.rsqrt %47 : vector<1x4x32xf32>
    %49 = vector.shape_cast %3 : vector<1x32xf32> to vector<1x1x32xf32>
    %50 = vector.broadcast %49 : vector<1x1x32xf32> to vector<1x4x32xf32>
    %51 = arith.mulf %48, %50 : vector<1x4x32xf32>
    %cst_20 = arith.constant 0.000000e+00 : f32
    %52 = vector.broadcast %cst_20 : f32 to vector<1x4x32xf32>
    %53 = arith.subf %52, %39 : vector<1x4x32xf32>
    %54 = arith.mulf %53, %51 : vector<1x4x32xf32>
    %55 = tpu.concatenate %51, %54 in 2 : vector<1x4x32xf32>, vector<1x4x32xf32> -> vector<1x4x64xf32>
    "tpu.trace_start"() <{level = 10 : i32, message = "bnk,bkc->bnc"}> : () -> ()
    %cst_21 = arith.constant dense<0.000000e+00> : vector<1x16x64xf32>
    %56 = tpu.matmul %21, %55, %cst_21 {dimension_numbers = #tpu.dot_dimension_numbers<[2], [1], [1], [2], [0, 0, 0, 1, 1, 2], [0], [0]>} : vector<1x16x4xf32>, vector<1x4x64xf32>, vector<1x16x64xf32> -> vector<1x16x64xf32>
    "tpu.trace_stop"() : () -> ()
    %57 = vector.extract_strided_slice %56 {offsets = [0, 0, 0], sizes = [1, 16, 32], strides = [1, 1, 1]} : vector<1x16x64xf32> to vector<1x16x32xf32>
    %58 = vector.extract_strided_slice %56 {offsets = [0, 0, 32], sizes = [1, 16, 32], strides = [1, 1, 1]} : vector<1x16x64xf32> to vector<1x16x32xf32>
    %c0_i32 = arith.constant 0 : i32
    %59 = vector.broadcast %c0_i32 : i32 to vector<1x16x1xi32>
    %60 = arith.cmpi ne, %1, %59 : vector<1x16x1xi32>
    %61 = arith.extui %60 : vector<1x16x1xi1> to vector<1x16x1xi32>
    %62 = arith.sitofp %61 : vector<1x16x1xi32> to vector<1x16x1xf32>
    %63 = arith.mulf %10, %57 : vector<1x16x32xf32>
    %64 = arith.addf %63, %58 : vector<1x16x32xf32>
    %65 = vector.shape_cast %4 : vector<1x32xf32> to vector<1x1x32xf32>
    %66 = vector.broadcast %65 : vector<1x1x32xf32> to vector<1x16x32xf32>
    %67 = arith.addf %64, %66 : vector<1x16x32xf32>
    %68 = vector.broadcast %62 : vector<1x16x1xf32> to vector<1x16x32xf32>
    %69 = arith.mulf %67, %68 : vector<1x16x32xf32>
    %c0_22 = arith.constant 0 : index
    %c0_23 = arith.constant 0 : index
    %c0_24 = arith.constant 0 : index
    %70 = vector.load %arg7[%c0_22, %c0_23, %c0_24] : memref<1x16x32xf32, #tpu.memory_space<vmem>>, vector<1x16x32xf32>
    tpu.vector_store %arg7[%c0_22, %c0_23, %c0_24], %69 {strides = array<i32>} : memref<1x16x32xf32, #tpu.memory_space<vmem>>, vector<1x16x32xf32>,
    return
  }
  func.func @transform_0(%arg0: i32, %arg1: i32) -> (i32, i32, i32) {
    %c0_i32 = arith.constant 0 : i32
    %c0_i32_0 = arith.constant 0 : i32
    return %arg0, %c0_i32, %arg1 : i32, i32, i32
  }
  func.func @transform_1(%arg0: i32, %arg1: i32) -> (i32, i32, i32) {
    %c0_i32 = arith.constant 0 : i32
    %c0_i32_0 = arith.constant 0 : i32
    %c0_i32_1 = arith.constant 0 : i32
    return %arg0, %c0_i32, %c0_i32_0 : i32, i32, i32
  }
  func.func @transform_2(%arg0: i32, %arg1: i32) -> (i32, i32, i32) {
    %c0_i32 = arith.constant 0 : i32
    %c0_i32_0 = arith.constant 0 : i32
    %c0_i32_1 = arith.constant 0 : i32
    return %arg0, %c0_i32, %c0_i32_0 : i32, i32, i32
  }
  func.func @transform_3(%arg0: i32, %arg1: i32) -> (i32, i32) {
    %c0_i32 = arith.constant 0 : i32
    %c0_i32_0 = arith.constant 0 : i32
    return %c0_i32, %arg1 : i32, i32
  }
  func.func @transform_4(%arg0: i32, %arg1: i32) -> (i32, i32) {
    %c0_i32 = arith.constant 0 : i32
    %c0_i32_0 = arith.constant 0 : i32
    return %c0_i32, %arg1 : i32, i32
  }
  func.func @transform_5(%arg0: i32, %arg1: i32) -> (i32, i32, i32) {
    %c0_i32 = arith.constant 0 : i32
    %c0_i32_0 = arith.constant 0 : i32
    return %arg0, %c0_i32, %arg1 : i32, i32, i32
  }
}

</mosaic_0001>

<llo_original>
// kernel: tpu_custom_call.1
$region0: #{tpu_custom_call.1}
  #allocation0 [shape = 'u32[]', space=smem, size = 0x4, offset = 0x4, fixed_abs, tag = 'smem constant byte address 0x4 - core index']
  #allocation1 [shape = 'u32[144,128]{1,0:T(1,128)}', space=vmem, size = 0x12000, scoped, tag = 'internal scratch']
  %s0 = inlined_call_operand.vmem [shape: f32[2,16,32], index: 0, kind: input, shape index: {}]
  %s1 = inlined_call_operand.vmem [shape: s32[2,16,1], index: 1, kind: input, shape index: {}]
  %s2 = inlined_call_operand.vmem [shape: s32[2,1,16], index: 2, kind: input, shape index: {}]
  %s3 = inlined_call_operand.vmem [shape: f32[1,32], index: 3, kind: input, shape index: {}]
  %s4 = inlined_call_operand.vmem [shape: f32[1,32], index: 4, kind: input, shape index: {}]
  %s5 = inlined_call_operand.hbm [shape: f32[2,16,32], index: 5, kind: output, shape index: {}]
  %s6 = sld [smem:[#allocation0]]
  $region53: #{tpu_custom_call.1} parent=0
    _
  %s8 = ssub.s32 1, %s6
  %s9 = scalar_select 0, %s8, %s6
  $region1: #{tpu_custom_call.1} parent=0
    #allocation2 [shape = 'u8[16384]{0}', space=vmem, size = 0x4000, scoped, tag = 'output window, operand 0']
    #allocation3 [shape = 's32[2]{0}', space=sflag, size = 0x8, scoped, tag = 'scoped memory for tpu_custom_call.1']
    %10 = vsyncpa [#allocation3], 0
    %s11 = scalar_lea.sflag [#allocation3], 1
    %12 = vsyncpa %s11, 0
    loop: start=0, step=1, limit=4
    $region2: #{tpu_custom_call.1} parent=1 // loop_pre_header
      _
    $region3: #{tpu_custom_call.1} parent=1 // loop_header
      %s14 = sphi 0, %s18
      %p15 = scmp.ge.s32.totalorder %s14, 4
      %s21 = sphi 0, %s33
      %s22 = sphi 0, %s29
      %s23 = sphi 0, %s21
      %s24 = sphi 0, %s22
      %s25 = sphi 0, %s23
      %s26 = sphi 0, %s24
      %s38 = sphi 0, %s40
      %s41 = sphi 0, %s38
      %s42 = sphi 0, %s41
      %s58 = sphi 0, %s42
      %s64 = sphi 0, %s66
      %s67 = sphi 0, %s64
      %s68 = sphi 0, %s67
      %s84 = sphi 0, %s68
      %s90 = sphi 0, %s92
      %s93 = sphi 0, %s90
      %s94 = sphi 0, %s93
      %s110 = sphi 0, %s94
      %s116 = sphi 0, %s118
      %s119 = sphi 0, %s116
      %s120 = sphi 0, %s119
      %s136 = sphi 0, %s120
      %s142 = sphi 0, %s144
      %s145 = sphi 0, %s142
      %s146 = sphi 0, %s145
      %s162 = sphi 0, %s146
      %s170 = sphi 0, %s172
      %s173 = sphi 0, %s170
      %s174 = sphi 0, %s173
      %s190 = sphi 0, %s174
    $region4: #{tpu_custom_call.1} parent=1 // loop_header_branch
      %17 = sbr.rel (%p15) target = $region8
    $region5: #{tpu_custom_call.1} parent=1 // loop_body
      %s19 = ssub.s32 %s14, 1
      %s20 = ssub.s32 %s14, 2
      %s27 = sadd.s32 1, %s22
      %p28 = scmp.ge.s32.totalorder %s27, 1
      %s29 = scalar_select %p28, 0, %s27
      %s30 = sadd.s32 1, %s21
      %s31 = scalar_select %p28, %s30, %s21
      %p32 = scmp.ge.s32.totalorder %s31, 2
      %s33 = scalar_select %p32, 0, %s31
      %s34 = ssub.s32 %s21, %s33
      %s35 = ssub.s32 %s22, %s29
      %s36 = sor.u32 %s34, %s35
      %p37 = scmp.eq.s32.totalorder %s36, 0
      %s39 = sadd.s32 %s38, 1
      %s40 = scalar_select %p37, %s38, %s39
      %p43 = pneg %p37
      %p44 = scmp.eq.s32.totalorder %s14, 1
      %p45 = por %p43, %p44
      %p46 = scmp.ne.s32.totalorder %s38, %s41
      %p47 = scmp.eq.s32.totalorder %s14, 0
      %p48 = por %p46, %p47
      %p49 = scmp.ne.s32.totalorder %s38, %s41
      %p50 = scmp.eq.s32.totalorder %s19, 1
      %p51 = por %p49, %p50
      %p52 = scmp.ne.s32.totalorder %s41, %s42
      %p53 = scmp.eq.s32.totalorder %s19, 0
      %p54 = por %p52, %p53
      %p55 = scmp.ne.s32.totalorder %s41, %s42
      %p56 = scmp.eq.s32.totalorder %s20, 1
      %p57 = por %p55, %p56
      %p59 = scmp.ne.s32.totalorder %s42, %s58
      %p60 = scmp.eq.s32.totalorder %s20, 0
      %p61 = por %p59, %p60
      %s62 = ssub.s32 %s21, %s33
      %p63 = scmp.eq.s32.totalorder %s62, 0
      %s65 = sadd.s32 %s64, 1
      %s66 = scalar_select %p63, %s64, %s65
      %p69 = pneg %p63
      %p70 = scmp.eq.s32.totalorder %s14, 1
      %p71 = por %p69, %p70
      %p72 = scmp.ne.s32.totalorder %s64, %s67
      %p73 = scmp.eq.s32.totalorder %s14, 0
      %p74 = por %p72, %p73
      %p75 = scmp.ne.s32.totalorder %s64, %s67
      %p76 = scmp.eq.s32.totalorder %s19, 1
      %p77 = por %p75, %p76
      %p78 = scmp.ne.s32.totalorder %s67, %s68
      %p79 = scmp.eq.s32.totalorder %s19, 0
      %p80 = por %p78, %p79
      %p81 = scmp.ne.s32.totalorder %s67, %s68
      %p82 = scmp.eq.s32.totalorder %s20, 1
      %p83 = por %p81, %p82
      %p85 = scmp.ne.s32.totalorder %s68, %s84
      %p86 = scmp.eq.s32.totalorder %s20, 0
      %p87 = por %p85, %p86
      %s88 = ssub.s32 %s21, %s33
      %p89 = scmp.eq.s32.totalorder %s88, 0
      %s91 = sadd.s32 %s90, 1
      %s92 = scalar_select %p89, %s90, %s91
      %p95 = pneg %p89
      %p96 = scmp.eq.s32.totalorder %s14, 1
      %p97 = por %p95, %p96
      %p98 = scmp.ne.s32.totalorder %s90, %s93
      %p99 = scmp.eq.s32.totalorder %s14, 0
      %p100 = por %p98, %p99
      %p101 = scmp.ne.s32.totalorder %s90, %s93
      %p102 = scmp.eq.s32.totalorder %s19, 1
      %p103 = por %p101, %p102
      %p104 = scmp.ne.s32.totalorder %s93, %s94
      %p105 = scmp.eq.s32.totalorder %s19, 0
      %p106 = por %p104, %p105
      %p107 = scmp.ne.s32.totalorder %s93, %s94
      %p108 = scmp.eq.s32.totalorder %s20, 1
      %p109 = por %p107, %p108
      %p111 = scmp.ne.s32.totalorder %s94, %s110
      %p112 = scmp.eq.s32.totalorder %s20, 0
      %p113 = por %p111, %p112
      %s114 = ssub.s32 %s22, %s29
      %p115 = scmp.eq.s32.totalorder %s114, 0
      %s117 = sadd.s32 %s116, 1
      %s118 = scalar_select %p115, %s116, %s117
      %p121 = pneg %p115
      %p122 = scmp.eq.s32.totalorder %s14, 1
      %p123 = por %p121, %p122
      %p124 = scmp.ne.s32.totalorder %s116, %s119
      %p125 = scmp.eq.s32.totalorder %s14, 0
      %p126 = por %p124, %p125
      %p127 = scmp.ne.s32.totalorder %s116, %s119
      %p128 = scmp.eq.s32.totalorder %s19, 1
      %p129 = por %p127, %p128
      %p130 = scmp.ne.s32.totalorder %s119, %s120
      %p131 = scmp.eq.s32.totalorder %s19, 0
      %p132 = por %p130, %p131
      %p133 = scmp.ne.s32.totalorder %s119, %s120
      %p134 = scmp.eq.s32.totalorder %s20, 1
      %p135 = por %p133, %p134
      %p137 = scmp.ne.s32.totalorder %s120, %s136
      %p138 = scmp.eq.s32.totalorder %s20, 0
      %p139 = por %p137, %p138
      %s140 = ssub.s32 %s22, %s29
      %p141 = scmp.eq.s32.totalorder %s140, 0
      %s143 = sadd.s32 %s142, 1
      %s144 = scalar_select %p141, %s142, %s143
      %p147 = pneg %p141
      %p148 = scmp.eq.s32.totalorder %s14, 1
      %p149 = por %p147, %p148
      %p150 = scmp.ne.s32.totalorder %s142, %s145
      %p151 = scmp.eq.s32.totalorder %s14, 0
      %p152 = por %p150, %p151
      %p153 = scmp.ne.s32.totalorder %s142, %s145
      %p154 = scmp.eq.s32.totalorder %s19, 1
      %p155 = por %p153, %p154
      %p156 = scmp.ne.s32.totalorder %s145, %s146
      %p157 = scmp.eq.s32.totalorder %s19, 0
      %p158 = por %p156, %p157
      %p159 = scmp.ne.s32.totalorder %s145, %s146
      %p160 = scmp.eq.s32.totalorder %s20, 1
      %p161 = por %p159, %p160
      %p163 = scmp.ne.s32.totalorder %s146, %s162
      %p164 = scmp.eq.s32.totalorder %s20, 0
      %p165 = por %p163, %p164
      %s166 = ssub.s32 %s21, %s33
      %s167 = ssub.s32 %s22, %s29
      %s168 = sor.u32 %s166, %s167
      %p169 = scmp.eq.s32.totalorder %s168, 0
      %s171 = sadd.s32 %s170, 1
      %s172 = scalar_select %p169, %s170, %s171
      %p175 = pneg %p169
      %p176 = scmp.eq.s32.totalorder %s14, 1
      %p177 = por %p175, %p176
      %p178 = scmp.ne.s32.totalorder %s170, %s173
      %p179 = scmp.eq.s32.totalorder %s14, 0
      %p180 = por %p178, %p179
      %p181 = scmp.ne.s32.totalorder %s170, %s173
      %p182 = scmp.eq.s32.totalorder %s19, 1
      %p183 = por %p181, %p182
      %p184 = scmp.ne.s32.totalorder %s173, %s174
      %p185 = scmp.eq.s32.totalorder %s19, 0
      %p186 = por %p184, %p185
      %p187 = scmp.ne.s32.totalorder %s173, %s174
      %p188 = scmp.eq.s32.totalorder %s20, 1
      %p189 = por %p187, %p188
      %p191 = scmp.ne.s32.totalorder %s174, %s190
      %p192 = scmp.eq.s32.totalorder %s20, 0
      %p193 = por %p191, %p192
      %p194 = scmp.le.s32.totalorder 1, %s14
      %p195 = scmp.lt.s32.totalorder %s14, 3
      %p196 = pnand %p194, %p195
      %p197 = pneg %p196
      // Predicated region
      $region9: #{tpu_custom_call.1} parent=5 // pred_check
        _
      $region10: #{tpu_custom_call.1} parent=5 // pred_check_branch
        %199 = sbr.rel (%p196) target = $region12
      $region11: #{tpu_custom_call.1} parent=5 // pred_region
        %s200 = ssub.s32 %s14, 1
        // Predicated region
        $region13: #{tpu_custom_call.1} parent=11 // pred_check
          %p201 = pneg %p132
        $region14: #{tpu_custom_call.1} parent=11 // pred_check_branch
          %203 = sbr.rel (%p201) target = $region16
        $region15: #{tpu_custom_call.1} parent=11 // pred_region
          %p204 = scmp.lt.s32.totalorder %s24, 0
          %s205 = scalar_select %p204, %s24, 0
          %s206 = scalar_lea.vmem %s3, %s205
        $region16: #{tpu_custom_call.1} parent=11 // pred_fallthru
          _
        // Predicated region
        $region17: #{tpu_custom_call.1} parent=11 // pred_check
          %p207 = pneg %p158
        $region18: #{tpu_custom_call.1} parent=11 // pred_check_branch
          %209 = sbr.rel (%p207) target = $region20
        $region19: #{tpu_custom_call.1} parent=11 // pred_region
          %p210 = scmp.lt.s32.totalorder %s24, 0
          %s211 = scalar_select %p210, %s24, 0
          %s212 = scalar_lea.vmem %s4, %s211
        $region20: #{tpu_custom_call.1} parent=11 // pred_fallthru
          _
      $region12: #{tpu_custom_call.1} parent=5 // pred_fallthru
        _
      %p213 = scmp.lt.s32.totalorder %s14, 2
      // Predicated region
      $region21: #{tpu_custom_call.1} parent=5 // pred_check
        %p214 = pneg %p213
      $region22: #{tpu_custom_call.1} parent=5 // pred_check_branch
        %216 = sbr.rel (%p214) target = $region24
      $region23: #{tpu_custom_call.1} parent=5 // pred_region
        // Predicated region
        $region25: #{tpu_custom_call.1} parent=23 // pred_check
          %p217 = pneg %p48
        $region26: #{tpu_custom_call.1} parent=23 // pred_check_branch
          %219 = sbr.rel (%p217) target = $region28
        $region27: #{tpu_custom_call.1} parent=23 // pred_region
          %p220 = scmp.lt.s32.totalorder %s21, 1
          %s221 = scalar_select %p220, %s21, 1
          %p222 = scmp.lt.s32.totalorder %s22, 0
          %s223 = scalar_select %p222, %s22, 0
          %s224 = smul.addr %s221, 2
          %s225 = sadd.s32 %s223, %s224
          %s226 = smul.addr %s225, 8
          %s227 = scalar_lea.vmem %s0, %s226
        $region28: #{tpu_custom_call.1} parent=23 // pred_fallthru
          _
        // Predicated region
        $region29: #{tpu_custom_call.1} parent=23 // pred_check
          %p228 = pneg %p74
        $region30: #{tpu_custom_call.1} parent=23 // pred_check_branch
          %230 = sbr.rel (%p228) target = $region32
        $region31: #{tpu_custom_call.1} parent=23 // pred_region
          %p231 = scmp.lt.s32.totalorder %s21, 1
          %s232 = scalar_select %p231, %s21, 1
          %s233 = smul.addr %s232, 2
          %s234 = smul.addr %s233, 8
          %s235 = scalar_lea.vmem %s1, %s234
        $region32: #{tpu_custom_call.1} parent=23 // pred_fallthru
          _
        // Predicated region
        $region33: #{tpu_custom_call.1} parent=23 // pred_check
          %p236 = pneg %p100
        $region34: #{tpu_custom_call.1} parent=23 // pred_check_branch
          %238 = sbr.rel (%p236) target = $region36
        $region35: #{tpu_custom_call.1} parent=23 // pred_region
          %p239 = scmp.lt.s32.totalorder %s21, 1
          %s240 = scalar_select %p239, %s21, 1
          %s241 = scalar_lea.vmem %s2, %s240
        $region36: #{tpu_custom_call.1} parent=23 // pred_fallthru
          _
      $region24: #{tpu_custom_call.1} parent=5 // pred_fallthru
        _
      %p242 = scmp.le.s32.totalorder 1, %s14
      %p243 = scmp.lt.s32.totalorder %s14, 3
      %p244 = pnand %p242, %p243
      %p245 = pneg %p244
      // Predicated region
      $region37: #{tpu_custom_call.1} parent=5 // pred_check
        _
      $region38: #{tpu_custom_call.1} parent=5 // pred_check_branch
        %247 = sbr.rel (%p244) target = $region40
      $region39: #{tpu_custom_call.1} parent=5 // pred_region
        %s248 = ssub.s32 %s14, 1
        %p249 = scmp.lt.s32.totalorder %s23, 1
        %s250 = scalar_select %p249, %s23, 1
        %p251 = scmp.lt.s32.totalorder %s24, 0
        %s252 = scalar_select %p251, %s24, 0
        %s253 = smul.addr %s250, 2
        %s254 = sadd.s32 %s252, %s253
        %s255 = smul.addr %s254, 8
        %s256 = scalar_lea.vmem %s0, %s255
        %p257 = pneg %p54
        %p258 = pneg %p51
        %p259 = scmp.lt.s32.totalorder %s23, 1
        %s260 = scalar_select %p259, %s23, 1
        %s261 = smul.addr %s260, 2
        %s262 = smul.addr %s261, 8
        %s263 = scalar_lea.vmem %s1, %s262
        %p264 = pneg %p80
        %p265 = pneg %p77
        %p266 = scmp.lt.s32.totalorder %s23, 1
        %s267 = scalar_select %p266, %s23, 1
        %s268 = scalar_lea.vmem %s2, %s267
        %p269 = pneg %p106
        %p270 = pneg %p103
        %p271 = scmp.lt.s32.totalorder %s24, 0
        %s272 = scalar_select %p271, %s24, 0
        %s273 = scalar_lea.vmem %s3, %s272
        %p274 = pneg %p132
        %p275 = pneg %p129
        %p276 = scmp.lt.s32.totalorder %s24, 0
        %s277 = scalar_select %p276, %s24, 0
        %s278 = scalar_lea.vmem %s4, %s277
        %p279 = pneg %p158
        %p280 = pneg %p155
        %p281 = pneg %p186
        %p282 = pneg %p183
        %s283 = sand.u32 %s173, 1
        %s284 = scalar_lea.sflag [#allocation3], %s283
        %s285 = sand.u32 %s173, 1
        %s286 = smul.addr %s285, 16
        %s287 = scalar_lea.vmem [#allocation2], %s286
        %p288 = scmp.lt.s32.totalorder %s23, 1
        %s289 = scalar_select %p288, %s23, 1
        %p290 = scmp.lt.s32.totalorder %s24, 0
        %s291 = scalar_select %p290, %s24, 0
        %s292 = smul.addr %s289, 2
        %s293 = sadd.s32 %s291, %s292
        %s294 = smul.addr %s293, 8
        %s295 = scalar_lea.vmem %s0, %s294
        %p296 = scmp.lt.s32.totalorder %s23, 1
        %s297 = scalar_select %p296, %s23, 1
        %s298 = smul.addr %s297, 2
        %s299 = smul.addr %s298, 8
        %s300 = scalar_lea.vmem %s1, %s299
        %p301 = scmp.lt.s32.totalorder %s23, 1
        %s302 = scalar_select %p301, %s23, 1
        %s303 = scalar_lea.vmem %s2, %s302
        %p304 = scmp.lt.s32.totalorder %s24, 0
        %s305 = scalar_select %p304, %s24, 0
        %s306 = scalar_lea.vmem %s3, %s305
        %p307 = scmp.lt.s32.totalorder %s24, 0
        %s308 = scalar_select %p307, %s24, 0
        %s309 = scalar_lea.vmem %s4, %s308
        %v310 = vld [vmem:[%s295] sm:$0xff]
        %v311 = vld [vmem:[%s295 + $0x8] sm:$0xff]
        %v312 = vld [vmem:[%s300] sm:$0xff]
        %v313 = vld [vmem:[%s300 + $0x8] sm:$0xff]
        %v314 = vld [vmem:[%s303] sm:$0x1]
        %v315 = vld [vmem:[%s306] sm:$0x1]
        %v316 = vld [vmem:[%s309] sm:$0x1]
        %vm317 = vcmask 261120
        %v318 = vsel %vm317, %v310, 0.0
        %v319 = vsel %vm317, %v311, 0.0
        %v320 = vadd.f32 %v318, %v319
        %v321 = vrot.slane %v320, 4
        %v322 = vadd.f32 %v320, %v321
        %v323 = vrot.slane %v322, 2
        %v324 = vadd.f32 %v322, %v323
        %v325 = vrot.slane %v324, 1
        %v326 = vadd.f32 %v324, %v325
        %v327 = vrcp.pop 16.0
        %v328 = vmul.f32 %v326, %v327
        %v329 = vsub.f32 %v310, %v328
        %v330 = vsub.f32 %v311, %v328
        %v331 = vlaneseq
        %v332 = vand.u32 %v331, 127
        %v333 = vadd.s32 %v332, 1
        %v334 = vlaneseq
        %v335 = vshrl.u32 %v334, 7
        %v336 = vadd.s32 %v335, 1
        %337 = vset.pattern.permute.xlu0 0
        %338 = vperm.xlu0 %337, %v312
        %v339 = vpop.permute.xlu0 %338
        %340 = vset.pattern.permute.xlu0 0
        %341 = vperm.xlu0 %340, %v313
        %v342 = vpop.permute.xlu0 %341
        %vm343 = vcmp.eq.s32.totalorder %v339, %v333
        %vm344 = vcmp.eq.s32.totalorder %v342, %v333
        %v345 = vsel %vm343, 1, 0
        %v346 = vsel %vm344, 1, 0
        %v347 = vcvt.s32.f32 %v345
        %v348 = vcvt.s32.f32 %v346
        %v349 = vlaneseq
        %v350 = vshrl.u32 %v349, 7
        %v351 = vsub.s32 0, %v350
        %v352 = vrot.slane %v314, %v351
        %vm353 = vcmp.eq.s32.totalorder %v352, %v336
        %v354 = vsel %vm353, 1, 0
        %v355 = vcvt.s32.f32 %v354
        %v356 = vmul.f32 %v329, %v329
        %v357 = vmul.f32 %v330, %v330
        %360 = vrot.lane.b32.xlu0 %v356, 32
        %v361 = vpop.permute.xlu0 %360
        %362 = vrot.lane.b32.xlu0 %v357, 32
        %v363 = vpop.permute.xlu0 %362
        %v366 = vsel %vm317, %v329, %v361
        %v367 = vsel %vm317, %v330, %v363
        %vm368 = vcmask 130048
        %v370 = vsel %vm368, %v355, 0
        %372 = vmatprep.subr.mxu0 0.0
        %373 = vmatpush1.msra.mxu0 0.0
        %374 = vmatprep.subr.mxu0 0.0
        %375 = vmatpush1.msra.mxu0 0.0
        %376 = vmatprep.subr.mxu0 0.0
        %377 = vmatpush1.msra.mxu0 0.0
        %378 = vmatprep.subr.mxu0 0.0
        %379 = vmatpush1.msra.mxu0 0.0
        %380 = vmatprep.subr.mxu0 0.0
        %381 = vmatpush1.msra.mxu0 0.0
        %382 = vmatprep.subr.mxu0 0.0
        %383 = vmatpush1.msra.mxu0 0.0
        %384 = vmatprep.subr.mxu0 0.0
        %385 = vmatpush1.msra.mxu0 0.0
        %386 = vmatprep.subr.mxu0 0.0
        %387 = vmatpush1.msra.mxu0 0.0
        %388 = vmatprep.subr.mxu0 0.0
        %389 = vmatpush1.msra.mxu0 0.0
        %390 = vmatprep.subr.mxu0 0.0
        %391 = vmatpush1.msra.mxu0 0.0
        %392 = vmatprep.subr.mxu0 0.0
        %393 = vmatpush1.msra.mxu0 0.0
        %394 = vmatprep.subr.mxu0 0.0
        %395 = vmatpush1.msra.mxu0 0.0
        %396 = vmatprep.subr.mxu0 0.0
        %397 = vmatpush1.msra.mxu0 0.0
        %398 = vmatprep.subr.mxu0 0.0
        %399 = vmatpush1.msra.mxu0 0.0
        %400 = vmatprep.subr.mxu0 0.0
        %401 = vmatpush1.msra.mxu0 %v367
        %402 = vmatprep.subr.mxu0 0.0
        %403 = vmatpush1.msra.mxu0 %v366
        %404 = vmatprep.subr.mxu0 0.0
        %405 = vmatpush2.msra.mxu0 0.0
        %406 = vmatprep.subr.mxu0 0.0
        %407 = vmatpush2.msra.mxu0 0.0
        %408 = vmatprep.subr.mxu0 0.0
        %409 = vmatpush2.msra.mxu0 0.0
        %410 = vmatprep.subr.mxu0 0.0
        %411 = vmatpush2.msra.mxu0 0.0
        %412 = vmatprep.subr.mxu0 0.0
        %413 = vmatpush2.msra.mxu0 0.0
        %414 = vmatprep.subr.mxu0 0.0
        %415 = vmatpush2.msra.mxu0 0.0
        %416 = vmatprep.subr.mxu0 0.0
        %417 = vmatpush2.msra.mxu0 0.0
        %418 = vmatprep.subr.mxu0 0.0
        %419 = vmatpush2.msra.mxu0 0.0
        %420 = vmatprep.subr.mxu0 0.0
        %421 = vmatpush2.msra.mxu0 0.0
        %422 = vmatprep.subr.mxu0 0.0
        %423 = vmatpush2.msra.mxu0 0.0
        %424 = vmatprep.subr.mxu0 0.0
        %425 = vmatpush2.msra.mxu0 0.0
        %426 = vmatprep.subr.mxu0 0.0
        %427 = vmatpush2.msra.mxu0 0.0
        %428 = vmatprep.subr.mxu0 0.0
        %429 = vmatpush2.msra.mxu0 0.0
        %430 = vmatprep.subr.mxu0 0.0
        %431 = vmatpush2.msra.mxu0 0.0
        %432 = vmatprep.subr.mxu0 0.0
        %433 = vmatpush2.msra.mxu0 0.0
        %434 = vmatprep.subr.mxu0 0.0
        %435 = vmatpush2.msra.mxu0 0.0
        %436 = vmatprep.mubr.f32.mxu0 0.0
        %437 = vmatmul.mubr.f32.gmra.mxu0 %v370
        %v438 = vpop.f32.mrf.mxu0
        %v439 = vadd.f32 0.0, %v438
        %v440 = vpop.f32.mrf.mxu0
        %441 = vdwg.mxu0
        %vm442 = vcmask 125952
        %v443 = vsel %vm442, %v355, 0.0
        %444 = vadd.xlane.f32.xlu0 %v443
        %v445 = vpop.xlane.xlu0 %444
        %v446 = vmax.f32 %v445, 1.0
        %v447 = vrcp.pop %v446
        %v448 = vmul.f32 1.0, %v447
        %v449 = vmul.f32 %v439, %v448
        %v450 = vmul.f32 %v449, %v449
        %452 = vrot.lane.b32.xlu0 %v450, 32
        %v453 = vpop.permute.xlu0 %452
        %v455 = vsub.f32 %v449, %v453
        %v456 = vmax.f32 %v455, 0.0
        %v457 = vadd.f32 %v456, 1e-05
        %v458 = vrsqrt.pop %v457
        %v460 = vlaneseq
        %v461 = vshrl.u32 %v460, 7
        %v462 = vsub.s32 0, %v461
        %v463 = vrot.slane %v315, %v462
        %464 = vrot.lane.b32.xlu0 %v463, 32
        %v465 = vpop.permute.xlu0 %464
        %v467 = vmul.f32 %v458, %v465
        %v468 = vsub.f32 0.0, %v449
        %470 = vrot.lane.b32.xlu0 %v467, 96
        %v471 = vpop.permute.xlu0 %470
        %v473 = vmul.f32 %v468, %v471
        %475 = vrot.lane.b32.xlu0 %v473, 32
        %v476 = vpop.permute.xlu0 %475
        %v478 = vsel %vm317, %v471, %v476
        %vm479 = vcmask 31744
        %v481 = vsel %vm479, %v347, 0
        %v484 = vsel %vm479, %v348, 0
        %vm486 = vcmask 1043456
        %v488 = vsel %vm486, %v478, 0
        %490 = vmatprep.subr.mxu0 0.0
        %491 = vmatpush1.msra.mxu0 0.0
        %492 = vmatprep.subr.mxu0 0.0
        %493 = vmatpush1.msra.mxu0 0.0
        %494 = vmatprep.subr.mxu0 0.0
        %495 = vmatpush1.msra.mxu0 0.0
        %496 = vmatprep.subr.mxu0 0.0
        %497 = vmatpush1.msra.mxu0 0.0
        %498 = vmatprep.subr.mxu0 0.0
        %499 = vmatpush1.msra.mxu0 0.0
        %500 = vmatprep.subr.mxu0 0.0
        %501 = vmatpush1.msra.mxu0 0.0
        %502 = vmatprep.subr.mxu0 0.0
        %503 = vmatpush1.msra.mxu0 0.0
        %504 = vmatprep.subr.mxu0 0.0
        %505 = vmatpush1.msra.mxu0 0.0
        %506 = vmatprep.subr.mxu0 0.0
        %507 = vmatpush1.msra.mxu0 0.0
        %508 = vmatprep.subr.mxu0 0.0
        %509 = vmatpush1.msra.mxu0 0.0
        %510 = vmatprep.subr.mxu0 0.0
        %511 = vmatpush1.msra.mxu0 0.0
        %512 = vmatprep.subr.mxu0 0.0
        %513 = vmatpush1.msra.mxu0 0.0
        %514 = vmatprep.subr.mxu0 0.0
        %515 = vmatpush1.msra.mxu0 0.0
        %516 = vmatprep.subr.mxu0 0.0
        %517 = vmatpush1.msra.mxu0 0.0
        %518 = vmatprep.subr.mxu0 0.0
        %519 = vmatpush1.msra.mxu0 0.0
        %520 = vmatprep.subr.mxu0 0.0
        %521 = vmatpush1.msra.mxu0 %v488
        %522 = vmatprep.subr.mxu0 0.0
        %523 = vmatpush2.msra.mxu0 0.0
        %524 = vmatprep.subr.mxu0 0.0
        %525 = vmatpush2.msra.mxu0 0.0
        %526 = vmatprep.subr.mxu0 0.0
        %527 = vmatpush2.msra.mxu0 0.0
        %528 = vmatprep.subr.mxu0 0.0
        %529 = vmatpush2.msra.mxu0 0.0
        %530 = vmatprep.subr.mxu0 0.0
        %531 = vmatpush2.msra.mxu0 0.0
        %532 = vmatprep.subr.mxu0 0.0
        %533 = vmatpush2.msra.mxu0 0.0
        %534 = vmatprep.subr.mxu0 0.0
        %535 = vmatpush2.msra.mxu0 0.0
        %536 = vmatprep.subr.mxu0 0.0
        %537 = vmatpush2.msra.mxu0 0.0
        %538 = vmatprep.subr.mxu0 0.0
        %539 = vmatpush2.msra.mxu0 0.0
        %540 = vmatprep.subr.mxu0 0.0
        %541 = vmatpush2.msra.mxu0 0.0
        %542 = vmatprep.subr.mxu0 0.0
        %543 = vmatpush2.msra.mxu0 0.0
        %544 = vmatprep.subr.mxu0 0.0
        %545 = vmatpush2.msra.mxu0 0.0
        %546 = vmatprep.subr.mxu0 0.0
        %547 = vmatpush2.msra.mxu0 0.0
        %548 = vmatprep.subr.mxu0 0.0
        %549 = vmatpush2.msra.mxu0 0.0
        %550 = vmatprep.subr.mxu0 0.0
        %551 = vmatpush2.msra.mxu0 0.0
        %552 = vmatprep.subr.mxu0 0.0
        %553 = vmatpush2.msra.mxu0 0.0
        %554 = vmatprep.mubr.f32.mxu0 0.0
        %555 = vmatmul.mubr.f32.gmra.mxu0 %v481
        %v556 = vpop.f32.mrf.mxu0
        %v557 = vadd.f32 0.0, %v556
        %v558 = vpop.f32.mrf.mxu0
        %559 = vmatprep.mubr.f32.mxu0 0.0
        %560 = vmatmul.mubr.f32.gmra.mxu0 %v484
        %v561 = vpop.f32.mrf.mxu0
        %v562 = vadd.f32 0.0, %v561
        %v563 = vpop.f32.mrf.mxu0
        %564 = vdwg.mxu0
        %vm565 = vcmp.ne.s32.totalorder %v312, 0
        %vm566 = vcmp.ne.s32.totalorder %v313, 0
        %v567 = vsel %vm565, 1, 0
        %v568 = vsel %vm566, 1, 0
        %v569 = vcvt.s32.f32 %v567
        %v570 = vcvt.s32.f32 %v568
        %v571 = vmul.f32 %v329, %v557
        %v572 = vmul.f32 %v330, %v562
        %575 = vrot.lane.b32.xlu0 %v557, 96
        %v576 = vpop.permute.xlu0 %575
        %577 = vrot.lane.b32.xlu0 %v562, 96
        %v578 = vpop.permute.xlu0 %577
        %v581 = vadd.f32 %v571, %v576
        %v582 = vadd.f32 %v572, %v578
        %v584 = vlaneseq
        %v585 = vshrl.u32 %v584, 7
        %v586 = vsub.s32 0, %v585
        %v587 = vrot.slane %v316, %v586
        %v589 = vadd.f32 %v581, %v587
        %v590 = vadd.f32 %v582, %v587
        %592 = vset.pattern.permute.xlu0 0
        %593 = vperm.xlu0 %592, %v569
        %v594 = vpop.permute.xlu0 %593
        %597 = vset.pattern.permute.xlu0 0
        %598 = vperm.xlu0 %597, %v570
        %v599 = vpop.permute.xlu0 %598
        %v601 = vmul.f32 %v589, %v594
        %v602 = vmul.f32 %v590, %v599
        %603 = vst.msk [vmem:[%s287] sm:$0xff] %vm317, %v601
        %604 = vst.msk [vmem:[%s287 + $0x8] sm:$0xff] %vm317, %v602
        %s605 = sand.u32 %s173, 1
        %s606 = scalar_lea.sflag [#allocation3], %s605
        %s607 = sand.u32 %s173, 1
        %s608 = smul.addr %s607, 16
        %s609 = scalar_lea.vmem [#allocation2], %s608
        // Predicated region
        $region41: #{tpu_custom_call.1} parent=39 // pred_check
          %p610 = pneg %p183
        $region42: #{tpu_custom_call.1} parent=39 // pred_check_branch
          %612 = sbr.rel (%p610) target = $region44
        $region43: #{tpu_custom_call.1} parent=39 // pred_region
          %s614 = ssub.s32 256, 256
          %615 = vsyncadd %s606, %s614
          %s616 = smul.addr %s23, 2
          %s617 = sadd.s32 %s24, %s616
          %s618 = smul.addr %s617, 128
          %s619 = scalar_lea.hbm %s5, %s618
          %s620 = sshll.u32 %s609, 4
          %s621 = int_to_ptr.vmem [resolvable:$true] %s620
          %626 = dma.vmem_to_hbm [thread:$0]  %s621, 256, %s619, %s606, 128, 128, 8
        $region44: #{tpu_custom_call.1} parent=39 // pred_fallthru
          _
      $region40: #{tpu_custom_call.1} parent=5 // pred_fallthru
        _
      %p627 = scmp.le.s32.totalorder 2, %s14
      // Predicated region
      $region45: #{tpu_custom_call.1} parent=5 // pred_check
        %p628 = pneg %p627
      $region46: #{tpu_custom_call.1} parent=5 // pred_check_branch
        %630 = sbr.rel (%p628) target = $region48
      $region47: #{tpu_custom_call.1} parent=5 // pred_region
        %s631 = ssub.s32 %s14, 2
        // Predicated region
        $region49: #{tpu_custom_call.1} parent=47 // pred_check
          %p632 = pneg %p189
        $region50: #{tpu_custom_call.1} parent=47 // pred_check_branch
          %634 = sbr.rel (%p632) target = $region52
        $region51: #{tpu_custom_call.1} parent=47 // pred_region
          %s635 = sand.u32 %s174, 1
          %s636 = scalar_lea.sflag [#allocation3], %s635
          %s637 = sand.u32 %s174, 1
          %s638 = smul.addr %s637, 16
          %s639 = scalar_lea.vmem [#allocation2], %s638
          %640 = dma.done %s636, 256
        $region52: #{tpu_custom_call.1} parent=47 // pred_fallthru
          _
      $region48: #{tpu_custom_call.1} parent=5 // pred_fallthru
        _
    $region6: #{tpu_custom_call.1} parent=1 // loop_footer
      %s18 = sadd.s32 1, %s14
    $region7: #{tpu_custom_call.1} parent=1 // loop_footer_branch
      %13 = sbr.rel target = $region3
    $region8: #{tpu_custom_call.1} parent=1 // loop_exit
      _
    %641 = vsyncpa [#allocation3], 1
    %s642 = scalar_lea.sflag [#allocation3], 1
    %643 = vsyncpa %s642, 1

</llo_original>
